<compile_context>
chip_gen: v6e
topology: v6e:2x2x1
jax: 0.10.0
libtpu: 0.0.40
codegen_flags: <defaults>
</compile_context>

<pallas_src>
import jax
import jax.numpy as jnp
from jax.experimental import pallas as pl
from jax.experimental.pallas import tpu as pltpu


def _round_up(x, m):
    return (x + m - 1) // m * m


def _value_kernel(x_ref, w_ref, b_ref, o_ref):
    # x_ref: [TB, D] VMEM (pipelined batch tile)
    # w_ref: [1, D]  VMEM (resident lane-dense row == PyTorch Linear weight)
    # b_ref: [1]     SMEM (scalar bias)
    # o_ref: [1, TB] VMEM (lane-dense row of per-state values)
    x = x_ref[...].astype(jnp.float32)
    w = w_ref[...].astype(jnp.float32)                 # [1, D] broadcasts over rows
    prod = x * w                                       # VPU elementwise
    vals = jnp.sum(prod[None, :, :], axis=-1)          # XLU lane reduce -> [1, TB] f32
    o_ref[...] = (vals + b_ref[0]).astype(o_ref.dtype)


def value_net_forward(state, weight, bias, *, block_rows=2048):
    """state: [B, D]; weight: [1, D] (PyTorch Linear layout); bias: [1] -> [B, 1]."""
    B, D = state.shape
    assert weight.shape == (1, D), "weight must be [1, state_dim] (PyTorch layout)"
    bias1d = bias.reshape((1,))

    # Tile rows: multiple of 128 so the output block is lane-dense, multiple of 8
    # for the sublane constraint on the input block. Cap at block_rows so
    # double-buffered tiles stay small even on v7x's 64 MiB VMEM.
    tb = min(_round_up(block_rows, 128), _round_up(B, 128))
    b_pad = _round_up(B, tb)
    if b_pad != B:
        # Zero-pad the ragged last tile; padded rows are sliced off below.
        state = jnp.pad(state, ((0, b_pad - B), (0, 0)))

    out_row = pl.pallas_call(
        _value_kernel,
        out_shape=jax.ShapeDtypeStruct((1, b_pad), state.dtype),
        grid=(b_pad // tb,),
        in_specs=[
            pl.BlockSpec((tb, D), lambda i: (i, 0)),   # state tile, pipelined
            pl.BlockSpec((1, D), lambda i: (0, 0)),    # weight row, resident
            pl.BlockSpec(memory_space=pltpu.MemorySpace.SMEM),  # bias scalar
        ],
        out_specs=pl.BlockSpec((1, tb), lambda i: (0, i)),      # lane-dense values
        compiler_params=pltpu.CompilerParams(
            dimension_semantics=("parallel",),
        ),
    )(state, weight, bias1d)

    # Layout plumbing back to the PyTorch [B, 1] output.
    return out_row.reshape(b_pad, 1)[:B]


if __name__ == "__main__":
    key = jax.random.PRNGKey(0)
    k_state, k_w, k_b = jax.random.split(key, 3)

    B = 8          # batch of states
    state_dim = 32

    state = jax.random.normal(k_state, (B, state_dim), dtype=jnp.float32)
    # Deterministic "init" of Linear(state_dim, 1) params (synthetic, not a checkpoint).
    bound = 1.0 / (state_dim ** 0.5)
    weight = jax.random.uniform(k_w, (1, state_dim), jnp.float32, -bound, bound)  # PyTorch layout
    bias = jax.random.uniform(k_b, (1,), jnp.float32, -bound, bound)

    out = value_net_forward(state, weight, bias)
    jax.block_until_ready(out)

    # Cross-check against plain JAX reference (value = state @ W^T + b).
    ref = state @ weight.T + bias[None, :]
    assert out.shape == (B, 1)
    assert jnp.allclose(out, ref, atol=1e-5, rtol=1e-5)

    print("KERNEL_OK")
</pallas_src>

<mosaic_0001>
module attributes {stable_mosaic.version = 11 : i64} {
  func.func @_value_kernel(%arg0: i32, %arg1: memref<128x32xf32, #tpu.memory_space<vmem>>, %arg2: memref<1x32xf32, #tpu.memory_space<vmem>>, %arg3: memref<1xf32, #tpu.memory_space<smem>>, %arg4: memref<1x128xf32, #tpu.memory_space<vmem>>) attributes {dimension_semantics = [#tpu.dimension_semantics<parallel>], iteration_bounds = array<i64: 1>, scalar_prefetch = 0 : i64, scratch_operands = 0 : i64, tpu.core_type = #tpu.core_type<tc>, window_params = [{transform_indices = @transform_0, window_bounds = array<i64: 128, 32>}, {pipeline_mode = #tpu.pipeline_mode<synchronous>, transform_indices = @transform_1, window_bounds = array<i64: 1, 32>}, {transform_indices = @transform_2, window_bounds = array<i64: 1>}, {transform_indices = @transform_3, window_bounds = array<i64: 1, 128>}]} {
    %c0 = arith.constant 0 : index
    %c0_0 = arith.constant 0 : index
    %0 = vector.load %arg1[%c0, %c0_0] : memref<128x32xf32, #tpu.memory_space<vmem>>, vector<128x32xf32>
    %c0_1 = arith.constant 0 : index
    %c0_2 = arith.constant 0 : index
    %1 = vector.load %arg2[%c0_1, %c0_2] : memref<1x32xf32, #tpu.memory_space<vmem>>, vector<1x32xf32>
    %2 = vector.broadcast %1 : vector<1x32xf32> to vector<128x32xf32>
    %3 = arith.mulf %0, %2 : vector<128x32xf32>
    %4 = vector.shape_cast %3 : vector<128x32xf32> to vector<1x128x32xf32>
    %cst = arith.constant dense<0.000000e+00> : vector<1x128xf32>
    %5 = vector.multi_reduction <add>, %4, %cst [2] : vector<1x128x32xf32> to vector<1x128xf32>
    %c0_3 = arith.constant 0 : index
    %6 = memref.load %arg3[%c0_3] : memref<1xf32, #tpu.memory_space<smem>>
    %7 = vector.broadcast %6 : f32 to vector<1x128xf32>
    %8 = arith.addf %5, %7 : vector<1x128xf32>
    %c0_4 = arith.constant 0 : index
    %c0_5 = arith.constant 0 : index
    %9 = vector.load %arg4[%c0_4, %c0_5] : memref<1x128xf32, #tpu.memory_space<vmem>>, vector<1x128xf32>
    tpu.vector_store %arg4[%c0_4, %c0_5], %8 {strides = array<i32>} : memref<1x128xf32, #tpu.memory_space<vmem>>, vector<1x128xf32>,
    return
  }
  func.func @transform_0(%arg0: i32) -> (i32, i32) {
    %c0_i32 = arith.constant 0 : i32
    %c0_i32_0 = arith.constant 0 : i32
    return %arg0, %c0_i32 : i32, i32
  }
  func.func @transform_1(%arg0: i32) -> (i32, i32) {
    %c0_i32 = arith.constant 0 : i32
    %c0_i32_0 = arith.constant 0 : i32
    %c0_i32_1 = arith.constant 0 : i32
    return %c0_i32, %c0_i32_0 : i32, i32
  }
  func.func @transform_2(%arg0: i32) -> i32 {
    %c0_i32 = arith.constant 0 : i32
    %c0_i32_0 = arith.constant 0 : i32
    return %c0_i32 : i32
  }
  func.func @transform_3(%arg0: i32) -> (i32, i32) {
    %c0_i32 = arith.constant 0 : i32
    %c0_i32_0 = arith.constant 0 : i32
    return %c0_i32, %arg0 : i32, i32
  }
}

</mosaic_0001>

<llo_original>
// kernel: tpu_custom_call.1
$region0: #{tpu_custom_call.1}
  #allocation0 [shape = 'u32[]', space=smem, size = 0x4, offset = 0x4, fixed_abs, tag = 'smem constant byte address 0x4 - core index']
  #allocation1 [shape = 'u32[144,128]{1,0:T(1,128)}', space=vmem, size = 0x12000, scoped, tag = 'internal scratch']
  #allocation2 [shape = 'f32[1]{0:T(128)S(6)}', space=smem, size = 0x200, scoped, tag = 'scoped memory for tpu_custom_call.1']
  %s0 = inlined_call_operand.vmem [shape: f32[128,32], index: 0, kind: input, shape index: {}]
  %s1 = inlined_call_operand.vmem [shape: f32[1,32], index: 1, kind: input, shape index: {}]
  %s2 = inlined_call_operand.<no memory space> [shape: f32[1], index: 2, kind: input, shape index: {}]
  %s3 = inlined_call_operand.hbm [shape: f32[1,128], index: 3, kind: output, shape index: {}]
  %s4 = sld [smem:[#allocation0]]
  $region22: #{tpu_custom_call.1} parent=0
    _
  %s6 = ssub.s32 1, %s4
  %s7 = scalar_select 0, %s6, %s4
  %8 = sst [smem:[#allocation2]] %s2
  $region1: #{tpu_custom_call.1} parent=0
    #allocation3 [shape = 'u8[512]{0}', space=vmem, size = 0x400, scoped, tag = 'output window, operand 0, single buffered']
    #allocation4 [shape = 's32[1]{0}', space=sflag, size = 0x4, scoped, tag = 'scoped memory for tpu_custom_call.1']
    %9 = vsyncpa [#allocation4], 0
    // Predicated region
    $region2: #{tpu_custom_call.1} parent=1 // pred_check
      _
    $region3: #{tpu_custom_call.1} parent=1 // pred_check_branch
      %11 = sbr.rel (0) target = $region5
    $region4: #{tpu_custom_call.1} parent=1 // pred_region
      _
    $region5: #{tpu_custom_call.1} parent=1 // pred_fallthru
      _
    // Predicated region
    $region6: #{tpu_custom_call.1} parent=1 // pred_check
      _
    $region7: #{tpu_custom_call.1} parent=1 // pred_check_branch
      %13 = sbr.rel (0) target = $region9
    $region8: #{tpu_custom_call.1} parent=1 // pred_region
      _
    $region9: #{tpu_custom_call.1} parent=1 // pred_fallthru
      _
    // Predicated region
    $region10: #{tpu_custom_call.1} parent=1 // pred_check
      _
    $region11: #{tpu_custom_call.1} parent=1 // pred_check_branch
      %15 = sbr.rel (0) target = $region13
    $region12: #{tpu_custom_call.1} parent=1 // pred_region
      _
    $region13: #{tpu_custom_call.1} parent=1 // pred_fallthru
      _
    %v16 = vld [vmem:[%s0] sm:$0xff]
    %v17 = vld [vmem:[%s0 + $0x8] sm:$0xff]
    %v18 = vld [vmem:[%s0 + $0x10] sm:$0xff]
    %v19 = vld [vmem:[%s0 + $0x18] sm:$0xff]
    %v20 = vld [vmem:[%s0 + $0x20] sm:$0xff]
    %v21 = vld [vmem:[%s0 + $0x28] sm:$0xff]
    %v22 = vld [vmem:[%s0 + $0x30] sm:$0xff]
    %v23 = vld [vmem:[%s0 + $0x38] sm:$0xff]
    %v24 = vld [vmem:[%s0 + $0x40] sm:$0xff]
    %v25 = vld [vmem:[%s0 + $0x48] sm:$0xff]
    %v26 = vld [vmem:[%s0 + $0x50] sm:$0xff]
    %v27 = vld [vmem:[%s0 + $0x58] sm:$0xff]
    %v28 = vld [vmem:[%s0 + $0x60] sm:$0xff]
    %v29 = vld [vmem:[%s0 + $0x68] sm:$0xff]
    %v30 = vld [vmem:[%s0 + $0x70] sm:$0xff]
    %v31 = vld [vmem:[%s0 + $0x78] sm:$0xff]
    %v32 = vld [vmem:[%s1] sm:$0x1]
    %v34 = vlaneseq
    %v35 = vshrl.u32 %v34, 7
    %v36 = vsub.s32 0, %v35
    %v37 = vrot.slane %v32, %v36
    %v39 = vmul.f32 %v16, %v37
    %v40 = vmul.f32 %v17, %v37
    %v41 = vmul.f32 %v18, %v37
    %v42 = vmul.f32 %v19, %v37
    %v43 = vmul.f32 %v20, %v37
    %v44 = vmul.f32 %v21, %v37
    %v45 = vmul.f32 %v22, %v37
    %v46 = vmul.f32 %v23, %v37
    %v47 = vmul.f32 %v24, %v37
    %v48 = vmul.f32 %v25, %v37
    %v49 = vmul.f32 %v26, %v37
    %v50 = vmul.f32 %v27, %v37
    %v51 = vmul.f32 %v28, %v37
    %v52 = vmul.f32 %v29, %v37
    %v53 = vmul.f32 %v30, %v37
    %v54 = vmul.f32 %v31, %v37
    %vm55 = vcmask 261120
    %v56 = vsel %vm55, %v39, 0.0
    %57 = vadd.xlane.f32.xlu0 %v56
    %v58 = vpop.xlane.xlu0 %57
    %v59 = vsel %vm55, %v40, 0.0
    %60 = vadd.xlane.f32.xlu0 %v59
    %v61 = vpop.xlane.xlu0 %60
    %v62 = vsel %vm55, %v41, 0.0
    %63 = vadd.xlane.f32.xlu0 %v62
    %v64 = vpop.xlane.xlu0 %63
    %v65 = vsel %vm55, %v42, 0.0
    %66 = vadd.xlane.f32.xlu0 %v65
    %v67 = vpop.xlane.xlu0 %66
    %v68 = vsel %vm55, %v43, 0.0
    %69 = vadd.xlane.f32.xlu0 %v68
    %v70 = vpop.xlane.xlu0 %69
    %v71 = vsel %vm55, %v44, 0.0
    %72 = vadd.xlane.f32.xlu0 %v71
    %v73 = vpop.xlane.xlu0 %72
    %v74 = vsel %vm55, %v45, 0.0
    %75 = vadd.xlane.f32.xlu0 %v74
    %v76 = vpop.xlane.xlu0 %75
    %v77 = vsel %vm55, %v46, 0.0
    %78 = vadd.xlane.f32.xlu0 %v77
    %v79 = vpop.xlane.xlu0 %78
    %v80 = vsel %vm55, %v47, 0.0
    %81 = vadd.xlane.f32.xlu0 %v80
    %v82 = vpop.xlane.xlu0 %81
    %v83 = vsel %vm55, %v48, 0.0
    %84 = vadd.xlane.f32.xlu0 %v83
    %v85 = vpop.xlane.xlu0 %84
    %v86 = vsel %vm55, %v49, 0.0
    %87 = vadd.xlane.f32.xlu0 %v86
    %v88 = vpop.xlane.xlu0 %87
    %v89 = vsel %vm55, %v50, 0.0
    %90 = vadd.xlane.f32.xlu0 %v89
    %v91 = vpop.xlane.xlu0 %90
    %v92 = vsel %vm55, %v51, 0.0
    %93 = vadd.xlane.f32.xlu0 %v92
    %v94 = vpop.xlane.xlu0 %93
    %v95 = vsel %vm55, %v52, 0.0
    %96 = vadd.xlane.f32.xlu0 %v95
    %v97 = vpop.xlane.xlu0 %96
    %v98 = vsel %vm55, %v53, 0.0
    %99 = vadd.xlane.f32.xlu0 %v98
    %v100 = vpop.xlane.xlu0 %99
    %v101 = vsel %vm55, %v54, 0.0
    %102 = vadd.xlane.f32.xlu0 %v101
    %v103 = vpop.xlane.xlu0 %102
    %s104 = sld [smem:[#allocation2]]
    %v105 = vstv %s104
    %v106 = vadd.f32 %v58, %v105
    %v107 = vadd.f32 %v61, %v105
    %v108 = vadd.f32 %v64, %v105
    %v109 = vadd.f32 %v67, %v105
    %v110 = vadd.f32 %v70, %v105
    %v111 = vadd.f32 %v73, %v105
    %v112 = vadd.f32 %v76, %v105
    %v113 = vadd.f32 %v79, %v105
    %v114 = vadd.f32 %v82, %v105
    %v115 = vadd.f32 %v85, %v105
    %v116 = vadd.f32 %v88, %v105
    %v117 = vadd.f32 %v91, %v105
    %v118 = vadd.f32 %v94, %v105
    %v119 = vadd.f32 %v97, %v105
    %v120 = vadd.f32 %v100, %v105
    %v121 = vadd.f32 %v103, %v105
    %v138 = vlaneseq
    %v139 = vand.u32 %v138, 127
    %v140 = vlaneseq
    %v141 = vshrl.u32 %v140, 7
    %v142 = vsub.s32 %v139, %v141
    %v143 = vrot.slane %v106, %v142
    %v144 = vadd.s32 %v139, 4294967288
    %v145 = vlaneseq
    %v146 = vshrl.u32 %v145, 7
    %v147 = vsub.s32 %v144, %v146
    %v148 = vrot.slane %v107, %v147
    %vm149 = vcmask 130112
    %v150 = vsel %vm149, %v148, %v143
    %v151 = vadd.s32 %v139, 4294967280
    %v152 = vlaneseq
    %v153 = vshrl.u32 %v152, 7
    %v154 = vsub.s32 %v151, %v153
    %v155 = vrot.slane %v108, %v154
    %vm156 = vcmask 195712
    %v157 = vsel %vm156, %v155, %v150
    %v158 = vadd.s32 %v139, 4294967272
    %v159 = vlaneseq
    %v160 = vshrl.u32 %v159, 7
    %v161 = vsub.s32 %v158, %v160
    %v162 = vrot.slane %v109, %v161
    %vm163 = vcmask 261312
    %v164 = vsel %vm163, %v162, %v157
    %v165 = vadd.s32 %v139, 4294967264
    %v166 = vlaneseq
    %v167 = vshrl.u32 %v166, 7
    %v168 = vsub.s32 %v165, %v167
    %v169 = vrot.slane %v110, %v168
    %vm170 = vcmask 326912
    %v171 = vsel %vm170, %v169, %v164
    %v172 = vadd.s32 %v139, 4294967256
    %v173 = vlaneseq
    %v174 = vshrl.u32 %v173, 7
    %v175 = vsub.s32 %v172, %v174
    %v176 = vrot.slane %v111, %v175
    %vm177 = vcmask 392512
    %v178 = vsel %vm177, %v176, %v171
    %v179 = vadd.s32 %v139, 4294967248
    %v180 = vlaneseq
    %v181 = vshrl.u32 %v180, 7
    %v182 = vsub.s32 %v179, %v181
    %v183 = vrot.slane %v112, %v182
    %vm184 = vcmask 458112
    %v185 = vsel %vm184, %v183, %v178
    %v186 = vadd.s32 %v139, 4294967240
    %v187 = vlaneseq
    %v188 = vshrl.u32 %v187, 7
    %v189 = vsub.s32 %v186, %v188
    %v190 = vrot.slane %v113, %v189
    %vm191 = vcmask 523712
    %v192 = vsel %vm191, %v190, %v185
    %v193 = vadd.s32 %v139, 4294967232
    %v194 = vlaneseq
    %v195 = vshrl.u32 %v194, 7
    %v196 = vsub.s32 %v193, %v195
    %v197 = vrot.slane %v114, %v196
    %vm198 = vcmask 589312
    %v199 = vsel %vm198, %v197, %v192
    %v200 = vadd.s32 %v139, 4294967224
    %v201 = vlaneseq
    %v202 = vshrl.u32 %v201, 7
    %v203 = vsub.s32 %v200, %v202
    %v204 = vrot.slane %v115, %v203
    %vm205 = vcmask 654912
    %v206 = vsel %vm205, %v204, %v199
    %v207 = vadd.s32 %v139, 4294967216
    %v208 = vlaneseq
    %v209 = vshrl.u32 %v208, 7
    %v210 = vsub.s32 %v207, %v209
    %v211 = vrot.slane %v116, %v210
    %vm212 = vcmask 720512
    %v213 = vsel %vm212, %v211, %v206
    %v214 = vadd.s32 %v139, 4294967208
    %v215 = vlaneseq
    %v216 = vshrl.u32 %v215, 7
    %v217 = vsub.s32 %v214, %v216
    %v218 = vrot.slane %v117, %v217
    %vm219 = vcmask 786112
    %v220 = vsel %vm219, %v218, %v213
    %v221 = vadd.s32 %v139, 4294967200
    %v222 = vlaneseq
    %v223 = vshrl.u32 %v222, 7
    %v224 = vsub.s32 %v221, %v223
    %v225 = vrot.slane %v118, %v224
    %vm226 = vcmask 851712
    %v227 = vsel %vm226, %v225, %v220
    %v228 = vadd.s32 %v139, 4294967192
    %v229 = vlaneseq
    %v230 = vshrl.u32 %v229, 7
    %v231 = vsub.s32 %v228, %v230
    %v232 = vrot.slane %v119, %v231
    %vm233 = vcmask 917312
    %v234 = vsel %vm233, %v232, %v227
    %v235 = vadd.s32 %v139, 4294967184
    %v236 = vlaneseq
    %v237 = vshrl.u32 %v236, 7
    %v238 = vsub.s32 %v235, %v237
    %v239 = vrot.slane %v120, %v238
    %vm240 = vcmask 982912
    %v241 = vsel %vm240, %v239, %v234
    %v242 = vadd.s32 %v139, 4294967176
    %v243 = vlaneseq
    %v244 = vshrl.u32 %v243, 7
    %v245 = vsub.s32 %v242, %v244
    %v246 = vrot.slane %v121, %v245
    %vm247 = vcmask 1048512
    %v248 = vsel %vm247, %v246, %v241
    %250 = vst [vmem:[#allocation3] sm:$0x1] %v248
    // Predicated region
    $region14: #{tpu_custom_call.1} parent=1 // pred_check
      _
    $region15: #{tpu_custom_call.1} parent=1 // pred_check_branch
      %252 = sbr.rel (0) target = $region17
    $region16: #{tpu_custom_call.1} parent=1 // pred_region
      %s254 = ssub.s32 16, 16
      %255 = vsyncadd [#allocation4], %s254
      %s257 = sshll.u32 [#allocation3], 4
      %s258 = int_to_ptr.vmem [resolvable:$true] %s257
      %260 = dma.vmem_to_hbm [thread:$0]  %s258, 16, %s3, [#allocation4]
    $region17: #{tpu_custom_call.1} parent=1 // pred_fallthru
      _
    // Predicated region
    $region18: #{tpu_custom_call.1} parent=1 // pred_check
      _
    $region19: #{tpu_custom_call.1} parent=1 // pred_check_branch
      %262 = sbr.rel (0) target = $region21
    $region20: #{tpu_custom_call.1} parent=1 // pred_region
      %263 = dma.done [#allocation4], 16
    $region21: #{tpu_custom_call.1} parent=1 // pred_fallthru
      _
    %264 = vsyncpa [#allocation4], 1

</llo_original>
